<compile_context>
chip_gen: v6e
topology: v6e:2x2x1
jax: 0.10.0
libtpu: 0.0.40
codegen_flags: <defaults>
</compile_context>

<pallas_src>
import functools

import jax
import jax.numpy as jnp
from jax.experimental import pallas as pl
from jax.experimental.pallas import tpu as pltpu

LANES = 128
SUBLANES = 8
CHUNK_ROWS = 512            # in-kernel elementwise chunk (256 KiB f32 temps)


def _num_tensorcores():
    """Best-effort TensorCores-per-chip (2 on v7x, 1 on v5e/v6e)."""
    try:
        info = pltpu.get_tpu_info()
    except Exception:
        return 1
    for name in ("num_cores", "cores_per_chip", "core_count", "num_tensorcores"):
        val = getattr(info, name, None)
        if isinstance(val, int) and val > 0:
            return min(val, 2)
    return 1


def _mse_partial_kernel(r_ref, t_ref, o_ref, *, rows_total, tile_rows,
                        chunk_rows, blocks_per_split, needs_mask):
    c = pl.program_id(0)   # TensorCore split (CORE_PARALLEL when 2 TCs)
    i = pl.program_id(1)   # row-tile index within the split (reduction axis)

    # The (8,128) output block doubles as this split's accumulator: it stays
    # resident in VMEM across the whole inner ("arbitrary") axis.
    @pl.when(i == 0)
    def _():
        o_ref[...] = jnp.zeros_like(o_ref)

    n_chunks = tile_rows // chunk_rows
    blk = c * blocks_per_split + i            # unclamped logical block index
    rows_left = rows_total - blk * tile_rows  # valid rows here (<=0 for dups)

    def chunk_sq(k):
        off = pl.multiple_of(k * chunk_rows, chunk_rows)
        d = (r_ref[pl.ds(off, chunk_rows), :].astype(jnp.float32)
             - t_ref[pl.ds(off, chunk_rows), :].astype(jnp.float32))
        return d * d, off

    def accum(sq):
        # Vreg-group partial sums: plain VALU adds into the resident (8,128)
        # accumulator; no cross-lane/sublane reductions in the hot loop.
        o_ref[...] += jnp.sum(
            sq.reshape(chunk_rows // SUBLANES, SUBLANES, LANES), axis=0)

    def fast_body(k):
        sq, _ = chunk_sq(k)
        accum(sq)

    def masked_body(k):
        sq, off = chunk_sq(k)
        # NOTE: rows at/after `rows_left` hold *undefined* data (partial-block
        # DMA, or a duplicated tail block on an uneven core split).  jnp.where
        # is a select, so garbage/NaNs never reach the accumulator -- do NOT
        # "optimize" this into a multiply.
        row_ids = off + jax.lax.broadcasted_iota(
            jnp.int32, (chunk_rows, LANES), 0)
        accum(jnp.where(row_ids < rows_left, sq, 0.0))

    def run(body):
        pl.loop(0, n_chunks)(body)

    if needs_mask:
        # Hoisted mask: interior blocks take the unmasked path; only the tail
        # (and any duplicated) block pays for the iota + select.
        @pl.when(rows_left >= tile_rows)
        def _():
            run(fast_body)

        @pl.when(rows_left < tile_rows)
        def _():
            run(masked_body)
    else:
        run(fast_body)


def mse_loss_pallas(reconstruction, target, *, tile_rows=None):
    """Mean squared error over all elements (== torch.nn.MSELoss default)."""
    assert reconstruction.shape == target.shape, "shapes must match"
    n_elements = reconstruction.size

    r_flat = reconstruction.reshape(-1)
    t_flat = target.reshape(-1)

    r_item = jnp.dtype(reconstruction.dtype).itemsize
    t_item = jnp.dtype(target.dtype).itemsize
    # Sublane packing: the *narrowest* dtype sets the row granularity
    # (8 rows for 4-byte, 16 for bf16, 32 for int8/fp8).
    row_gran = SUBLANES * max(1, 4 // min(r_item, t_item))

    # Only the lane dimension still forces a pad: element counts that are not
    # a multiple of 128 get zero-padded to the next 128 (both inputs padded
    # with the same zeros => zero contribution to the sum of squares).  All
    # row-level unevenness is masked in-kernel with no host-side copy.
    # TODO(synk): fold the <128-element tail into a flat-index-masked 1-D
    # kernel so lane-unaligned sizes also avoid the full-array pad copy.
    pad = (-n_elements) % LANES
    if pad:
        r_flat = jnp.pad(r_flat, (0, pad))
        t_flat = jnp.pad(t_flat, (0, pad))
    rows = (n_elements + pad) // LANES
    r2d = r_flat.reshape(rows, LANES)
    t2d = t_flat.reshape(rows, LANES)

    # Tile selection: as large as possible while keeping each input block
    # <= 4 MiB (8192 f32 rows).  Double-buffered inputs then use <= 16 MiB and
    # in-kernel temporaries stay tiny (CHUNK_ROWS chunks), leaving headroom on
    # v7x's 64 MiB-per-TC VMEM (32 MiB scoped default).
    max_item = max(r_item, t_item)
    max_tr = (4 << 20) // (LANES * max_item)
    if tile_rows is None:
        tile_rows = max_tr
    rows_rounded = -(-rows // row_gran) * row_gran
    tr = min(int(tile_rows), max_tr, rows_rounded)
    if tr >= CHUNK_ROWS:
        tr -= tr % CHUNK_ROWS
        chunk_rows = CHUNK_ROWS
    else:
        tr = max(row_gran, tr - tr % row_gran)
        chunk_rows = tr

    num_blocks = -(-rows // tr)
    # Split the reduction across TensorCores only when the chip really has two
    # (v7x).  On 1-TC chips a split would just serialize two half-length loops
    # and can force a duplicated (wasted) tail-block fetch.
    num_splits = _num_tensorcores() if num_blocks >= 2 else 1
    blocks_per_split = -(-num_blocks // num_splits)
    needs_mask = (num_splits * blocks_per_split * tr) != rows
    clamp_blk = (num_splits * blocks_per_split) > num_blocks

    kernel = functools.partial(
        _mse_partial_kernel,
        rows_total=rows, tile_rows=tr, chunk_rows=chunk_rows,
        blocks_per_split=blocks_per_split, needs_mask=needs_mask)

    def in_map(c, i):
        blk = c * blocks_per_split + i
        if clamp_blk:
            # Duplicated tail blocks (uneven core split) stay in-bounds; they
            # are fully masked to zero in-kernel.
            blk = jnp.minimum(blk, num_blocks - 1)
        return (blk, 0)

    in_block_bytes = tr * LANES * (r_item + t_item)
    vmem_limit_bytes = int(min(max(2 * in_block_bytes + (6 << 20), 16 << 20),
                               32 << 20))

    if num_splits > 1 and hasattr(pltpu, "CORE_PARALLEL"):
        dim_sem = (pltpu.CORE_PARALLEL, pltpu.ARBITRARY)
    elif num_splits > 1:
        dim_sem = ("parallel", "arbitrary")
    else:
        dim_sem = ("arbitrary", "arbitrary")

    out_bytes = num_splits * SUBLANES * LANES * 4
    cost = pl.CostEstimate(
        flops=3 * n_elements, transcendentals=0,
        bytes_accessed=n_elements * (r_item + t_item) + out_bytes)

    partials = pl.pallas_call(
        kernel,
        out_shape=jax.ShapeDtypeStruct((num_splits * SUBLANES, LANES),
                                       jnp.float32),
        grid_spec=pltpu.PrefetchScalarGridSpec(
            num_scalar_prefetch=0,
            grid=(num_splits, blocks_per_split),
            in_specs=[
                # Default double buffering: with 4 MiB blocks a Buffered(3)
                # sweep would push past the ~24 MiB v7x headroom target.
                pl.BlockSpec((tr, LANES), in_map),
                pl.BlockSpec((tr, LANES), in_map),
            ],
            out_specs=pl.BlockSpec((SUBLANES, LANES), lambda c, i: (c, 0)),
        ),
        compiler_params=pltpu.CompilerParams(
            dimension_semantics=dim_sem,
            vmem_limit_bytes=vmem_limit_bytes,
        ),
        cost_estimate=cost,
    )(r2d, t2d)

    # Tiny final reduce + mean outside the kernel.  The per-lane-slot f32
    # partial sums keep relative error ~num_blocks * 2^-24; switch to a
    # compensated reduce here if multi-billion-element inputs need tighter.
    return jnp.sum(partials) / jnp.float32(n_elements)


if __name__ == "__main__":
    key = jax.random.PRNGKey(0)
    keys = jax.random.split(key, 10)

    def ref_mse(r, t):
        return jnp.mean((r.astype(jnp.float32) - t.astype(jnp.float32)) ** 2)

    # 1) Small autoencoder-style shapes (NCHW): batch=2, channels=4, 16x16.
    r = jax.random.normal(keys[0], (2, 4, 16, 16), dtype=jnp.float32)
    t = jax.random.normal(keys[1], (2, 4, 16, 16), dtype=jnp.float32)
    loss = jax.block_until_ready(mse_loss_pallas(r, t))
    assert jnp.allclose(loss, ref_mse(r, t), rtol=1e-5, atol=1e-6), (loss, ref_mse(r, t))

    # 2) Multi-block reduction with a masked partial tail (forced small tile),
    #    plus the default big-tile path on the same data.
    r = jax.random.normal(keys[2], (9, 65536), dtype=jnp.float32)
    t = jax.random.normal(keys[3], (9, 65536), dtype=jnp.float32)
    ref = ref_mse(r, t)
    loss_small = jax.block_until_ready(mse_loss_pallas(r, t, tile_rows=1024))
    assert jnp.allclose(loss_small, ref, rtol=1e-4, atol=1e-6), (loss_small, ref)
    loss_big = jax.block_until_ready(mse_loss_pallas(r, t))
    assert jnp.allclose(loss_big, ref, rtol=1e-4, atol=1e-6), (loss_big, ref)

    # 3) Lane-aligned but row-odd size (1920 elems = 15 rows of 128): exercises
    #    the in-kernel row mask with NO host-side padding copy.
    r = jax.random.normal(keys[4], (3, 5, 128), dtype=jnp.float32)
    t = jax.random.normal(keys[5], (3, 5, 128), dtype=jnp.float32)
    loss = jax.block_until_ready(mse_loss_pallas(r, t))
    assert jnp.allclose(loss, ref_mse(r, t), rtol=1e-5, atol=1e-6), (loss, ref_mse(r, t))

    # 4) bf16 inputs (16-row sublane packing path).
    r = jax.random.normal(keys[6], (4, 32, 32), dtype=jnp.bfloat16)
    t = jax.random.normal(keys[7], (4, 32, 32), dtype=jnp.bfloat16)
    loss = jax.block_until_ready(mse_loss_pallas(r, t))
    assert jnp.allclose(loss, ref_mse(r, t), rtol=2e-2, atol=1e-3), (loss, ref_mse(r, t))

    # 5) Lane-unaligned size (231 elements): pad-to-128 fallback path.
    r = jax.random.normal(keys[8], (7, 33), dtype=jnp.float32)
    t = jax.random.normal(keys[9], (7, 33), dtype=jnp.float32)
    loss = jax.block_until_ready(mse_loss_pallas(r, t))
    assert jnp.allclose(loss, ref_mse(r, t), rtol=1e-5, atol=1e-6), (loss, ref_mse(r, t))

    print("KERNEL_OK")
</pallas_src>

<mosaic_0001>
module attributes {stable_mosaic.version = 11 : i64} {
  func.func @_mse_partial_kernel(%arg0: i32, %arg1: i32, %arg2: memref<16x128xf32, #tpu.memory_space<vmem>>, %arg3: memref<16x128xf32, #tpu.memory_space<vmem>>, %arg4: memref<8x128xf32, #tpu.memory_space<vmem>>) attributes {dimension_semantics = [#tpu.dimension_semantics<arbitrary>, #tpu.dimension_semantics<arbitrary>], iteration_bounds = array<i64: 1, 1>, scalar_prefetch = 0 : i64, scratch_operands = 0 : i64, tpu.core_type = #tpu.core_type<tc>, window_params = [{transform_indices = @transform_0, window_bounds = array<i64: 16, 128>}, {transform_indices = @transform_1, window_bounds = array<i64: 16, 128>}, {transform_indices = @transform_2, window_bounds = array<i64: 8, 128>}]} {
    %c0_i32 = arith.constant 0 : i32
    %0 = arith.cmpi eq, %arg1, %c0_i32 : i32
    %1 = arith.extui %0 : i1 to i32
    %c0_i32_0 = arith.constant 0 : i32
    %2 = arith.cmpi ne, %1, %c0_i32_0 : i32
    scf.if %2 {
      %cst_9 = arith.constant 0.000000e+00 : f32
      %18 = vector.broadcast %cst_9 : f32 to vector<8x128xf32>
      %c0_10 = arith.constant 0 : index
      %c0_11 = arith.constant 0 : index
      %19 = vector.load %arg4[%c0_10, %c0_11] : memref<8x128xf32, #tpu.memory_space<vmem>>, vector<8x128xf32>
      tpu.vector_store %arg4[%c0_10, %c0_11], %18 {strides = array<i32>} : memref<8x128xf32, #tpu.memory_space<vmem>>, vector<8x128xf32>,
    } else {
    }
    %c0_i32_1 = arith.constant 0 : i32
    %c1_i32 = arith.constant 1 : i32
    %3 = arith.muli %c0_i32_1, %c1_i32 : i32
    %c0_i32_2 = arith.constant 0 : i32
    %4 = arith.addi %c0_i32_2, %3 : i32
    %c16_i32 = arith.constant 16 : i32
    %5 = arith.muli %4, %c16_i32 : i32
    %6 = tpu.assume_multiple %5, 16 : i32
    %7 = arith.index_cast %6 : i32 to index
    %c0 = arith.constant 0 : index
    %8 = vector.load %arg2[%7, %c0] : memref<16x128xf32, #tpu.memory_space<vmem>>, vector<16x128xf32>
    %9 = arith.index_cast %6 : i32 to index
    %c0_3 = arith.constant 0 : index
    %10 = vector.load %arg3[%9, %c0_3] : memref<16x128xf32, #tpu.memory_space<vmem>>, vector<16x128xf32>
    %11 = arith.subf %8, %10 : vector<16x128xf32>
    %12 = arith.mulf %11, %11 : vector<16x128xf32>
    %c0_4 = arith.constant 0 : index
    %c0_5 = arith.constant 0 : index
    %13 = vector.load %arg4[%c0_4, %c0_5] : memref<8x128xf32, #tpu.memory_space<vmem>>, vector<8x128xf32>
    %14 = vector.shape_cast %12 : vector<16x128xf32> to vector<2x8x128xf32>
    %cst = arith.constant dense<0.000000e+00> : vector<8x128xf32>
    %15 = vector.multi_reduction <add>, %14, %cst [0] : vector<2x8x128xf32> to vector<8x128xf32>
    %16 = arith.addf %13, %15 : vector<8x128xf32>
    %c0_6 = arith.constant 0 : index
    %c0_7 = arith.constant 0 : index
    %17 = vector.load %arg4[%c0_6, %c0_7] : memref<8x128xf32, #tpu.memory_space<vmem>>, vector<8x128xf32>
    tpu.vector_store %arg4[%c0_6, %c0_7], %16 {strides = array<i32>} : memref<8x128xf32, #tpu.memory_space<vmem>>, vector<8x128xf32>,
    %c1_i32_8 = arith.constant 1 : i32
    return
  }
  func.func @transform_0(%arg0: i32, %arg1: i32) -> (i32, i32) {
    %c1_i32 = arith.constant 1 : i32
    %0 = arith.muli %arg0, %c1_i32 : i32
    %1 = arith.addi %0, %arg1 : i32
    %c0_i32 = arith.constant 0 : i32
    %c0_i32_0 = arith.constant 0 : i32
    return %1, %c0_i32 : i32, i32
  }
  func.func @transform_1(%arg0: i32, %arg1: i32) -> (i32, i32) {
    %c1_i32 = arith.constant 1 : i32
    %0 = arith.muli %arg0, %c1_i32 : i32
    %1 = arith.addi %0, %arg1 : i32
    %c0_i32 = arith.constant 0 : i32
    %c0_i32_0 = arith.constant 0 : i32
    return %1, %c0_i32 : i32, i32
  }
  func.func @transform_2(%arg0: i32, %arg1: i32) -> (i32, i32) {
    %c0_i32 = arith.constant 0 : i32
    %c0_i32_0 = arith.constant 0 : i32
    return %arg0, %c0_i32 : i32, i32
  }
}

</mosaic_0001>

<llo_original>
// kernel: tpu_custom_call.1
$region0: #{tpu_custom_call.1}
  #allocation0 [shape = 'u32[]', space=smem, size = 0x4, offset = 0x4, fixed_abs, tag = 'smem constant byte address 0x4 - core index']
  #allocation1 [shape = 'u32[144,128]{1,0:T(1,128)}', space=vmem, size = 0x12000, scoped, tag = 'internal scratch']
  %s0 = inlined_call_operand.hbm [shape: f32[16,128], index: 0, kind: input, shape index: {}]
  %s1 = inlined_call_operand.hbm [shape: f32[16,128], index: 1, kind: input, shape index: {}]
  %s2 = inlined_call_operand.hbm [shape: f32[8,128], index: 2, kind: output, shape index: {}]
  %s3 = sld [smem:[#allocation0]]
  $region30: #{tpu_custom_call.1} parent=0
    _
  %s5 = ssub.s32 1, %s3
  %s6 = scalar_select 0, %s5, %s3
  $region1: #{tpu_custom_call.1} parent=0
    #allocation2 [shape = 'u8[8192]{0}', space=vmem, size = 0x2000, scoped, tag = 'input window, operand 0, single buffered']
    #allocation3 [shape = 's32[1]{0}', space=sflag, size = 0x4, scoped, tag = 'scoped memory for tpu_custom_call.1']
    #allocation4 [shape = 's32[1]{0}', space=sflag, size = 0x4, scoped, tag = 'scoped memory for tpu_custom_call.1']
    #allocation5 [shape = 'u8[8192]{0}', space=vmem, size = 0x2000, scoped, tag = 'input window, operand 1, single buffered']
    #allocation6 [shape = 's32[1]{0}', space=sflag, size = 0x4, scoped, tag = 'scoped memory for tpu_custom_call.1']
    #allocation7 [shape = 'u8[4096]{0}', space=vmem, size = 0x1000, scoped, tag = 'output window, operand 0, single buffered']
    %7 = vsyncpa [#allocation3], 0
    %8 = vsyncpa [#allocation6], 0
    %9 = vsyncpa [#allocation4], 0
    // Predicated region
    $region2: #{tpu_custom_call.1} parent=1 // pred_check
      _
    $region3: #{tpu_custom_call.1} parent=1 // pred_check_branch
      %11 = sbr.rel (0) target = $region5
    $region4: #{tpu_custom_call.1} parent=1 // pred_region
      %s12 = sadd.s32 0, 0
      %s13 = smul.u32 2, %s12
      %s15 = ssub.s32 256, 256
      %16 = vsyncadd [#allocation3], %s15
      %s17 = smul.addr %s13, 128
      %s18 = scalar_lea.hbm %s0, %s17
      %s19 = sshll.u32 [#allocation2], 4
      %s20 = int_to_ptr.vmem [resolvable:$true] %s19
      %25 = dma.hbm_to_vmem [thread:$0]  %s18, 256, %s20, [#allocation3], 128, 128, 8
    $region5: #{tpu_custom_call.1} parent=1 // pred_fallthru
      _
    // Predicated region
    $region6: #{tpu_custom_call.1} parent=1 // pred_check
      _
    $region7: #{tpu_custom_call.1} parent=1 // pred_check_branch
      %27 = sbr.rel (0) target = $region9
    $region8: #{tpu_custom_call.1} parent=1 // pred_region
      %s28 = sadd.s32 0, 0
      %s29 = smul.u32 2, %s28
      %s31 = ssub.s32 256, 256
      %32 = vsyncadd [#allocation6], %s31
      %s33 = smul.addr %s29, 128
      %s34 = scalar_lea.hbm %s1, %s33
      %s35 = sshll.u32 [#allocation5], 4
      %s36 = int_to_ptr.vmem [resolvable:$true] %s35
      %41 = dma.hbm_to_vmem [thread:$0]  %s34, 256, %s36, [#allocation6], 128, 128, 8
    $region9: #{tpu_custom_call.1} parent=1 // pred_fallthru
      _
    // Predicated region
    $region10: #{tpu_custom_call.1} parent=1 // pred_check
      _
    $region11: #{tpu_custom_call.1} parent=1 // pred_check_branch
      %43 = sbr.rel (0) target = $region13
    $region12: #{tpu_custom_call.1} parent=1 // pred_region
      %44 = dma.done [#allocation3], 256
    $region13: #{tpu_custom_call.1} parent=1 // pred_fallthru
      _
    // Predicated region
    $region14: #{tpu_custom_call.1} parent=1 // pred_check
      _
    $region15: #{tpu_custom_call.1} parent=1 // pred_check_branch
      %46 = sbr.rel (0) target = $region17
    $region16: #{tpu_custom_call.1} parent=1 // pred_region
      %47 = dma.done [#allocation6], 256
    $region17: #{tpu_custom_call.1} parent=1 // pred_fallthru
      _
    %s48 = sadd.s32 0, 0
    %s49 = smul.u32 2, %s48
    %s50 = sadd.s32 0, 0
    %s51 = smul.u32 2, %s50
    %p52 = scmp.eq.s32.totalorder 0, 0
    // Predicated region
    $region18: #{tpu_custom_call.1} parent=1 // pred_check
      %p53 = pneg %p52
    $region19: #{tpu_custom_call.1} parent=1 // pred_check_branch
      %55 = sbr.rel (%p53) target = $region21
    $region20: #{tpu_custom_call.1} parent=1 // pred_region
      %56 = vst [vmem:[#allocation7] sm:$0xff] 0.0
    $region21: #{tpu_custom_call.1} parent=1 // pred_fallthru
      _
    %v57 = vld [vmem:[#allocation2] sm:$0xff]
    %v58 = vld [vmem:[#allocation2 + $0x8] sm:$0xff]
    %v59 = vld [vmem:[#allocation5] sm:$0xff]
    %v60 = vld [vmem:[#allocation5 + $0x8] sm:$0xff]
    %v61 = vsub.f32 %v57, %v59
    %v62 = vsub.f32 %v58, %v60
    %v63 = vmul.f32 %v61, %v61
    %v64 = vmul.f32 %v62, %v62
    %v65 = vld [vmem:[#allocation7] sm:$0xff]
    %v66 = vadd.f32 %v63, %v64
    %v67 = vadd.f32 %v65, %v66
    %68 = vst [vmem:[#allocation7] sm:$0xff] %v67
    // Predicated region
    $region22: #{tpu_custom_call.1} parent=1 // pred_check
      _
    $region23: #{tpu_custom_call.1} parent=1 // pred_check_branch
      %70 = sbr.rel (0) target = $region25
    $region24: #{tpu_custom_call.1} parent=1 // pred_region
      %s72 = ssub.s32 128, 128
      %73 = vsyncadd [#allocation4], %s72
      %s75 = sshll.u32 [#allocation7], 4
      %s76 = int_to_ptr.vmem [resolvable:$true] %s75
      %78 = dma.vmem_to_hbm [thread:$0]  %s76, 128, %s2, [#allocation4]
    $region25: #{tpu_custom_call.1} parent=1 // pred_fallthru
      _
    // Predicated region
    $region26: #{tpu_custom_call.1} parent=1 // pred_check
      _
    $region27: #{tpu_custom_call.1} parent=1 // pred_check_branch
      %80 = sbr.rel (0) target = $region29
    $region28: #{tpu_custom_call.1} parent=1 // pred_region
      %81 = dma.done [#allocation4], 128
    $region29: #{tpu_custom_call.1} parent=1 // pred_fallthru
      _
    %82 = vsyncpa [#allocation3], 1
    %83 = vsyncpa [#allocation6], 1
    %84 = vsyncpa [#allocation4], 1

</llo_original>
